<compile_context>
chip_gen: v7x
topology: tpu7x:2x2x1
jax: 0.10.0
libtpu: 0.0.40
codegen_flags: <defaults>
</compile_context>

<pallas_src>
import functools

import jax
import jax.numpy as jnp
from jax.experimental import pallas as pl
from jax.experimental.pallas import tpu as pltpu

LANE = 128
SUBLANE = 8


def _round_up(x, m):
    return ((x + m - 1) // m) * m


def _invariant_spec(block_shape, index_map):
    """BlockSpec for a grid-invariant operand: single-buffer it (halves its VMEM)."""
    try:
        return pl.BlockSpec(block_shape, index_map, pipeline_mode=pl.Buffered(1))
    except (TypeError, ValueError, AttributeError):
        # Older JAX without pipeline_mode / Buffered: fall back to default buffering.
        return pl.BlockSpec(block_shape, index_map)


# ------------------------------- kernel bodies ------------------------------- #

def _fused_kernel(x_ref, w_ref, b_ref, o_ref, *, compute_dtype):
    # o = x @ (W1 @ W2) + (b1 @ W2 + b2)
    x = x_ref[...].astype(compute_dtype)
    acc = jnp.dot(x, w_ref[...], preferred_element_type=jnp.float32)
    o_ref[...] = (acc + b_ref[...]).astype(o_ref.dtype)


def _fused_kernel_ktiled(x_ref, w_ref, b_ref, o_ref, acc_ref, *, compute_dtype):
    k = pl.program_id(1)

    @pl.when(k == 0)
    def _():
        acc_ref[...] = jnp.zeros_like(acc_ref)

    x = x_ref[...].astype(compute_dtype)
    acc_ref[...] += jnp.dot(x, w_ref[...], preferred_element_type=jnp.float32)

    @pl.when(k == pl.num_programs(1) - 1)
    def _():
        o_ref[...] = (acc_ref[...] + b_ref[...]).astype(o_ref.dtype)


def _two_stage_kernel(x_ref, w1_ref, b1_ref, w2_ref, b2_ref, o_ref, *, compute_dtype):
    x = x_ref[...].astype(compute_dtype)
    h = jnp.dot(x, w1_ref[...], preferred_element_type=jnp.float32) + b1_ref[...]
    acc = jnp.dot(h.astype(compute_dtype), w2_ref[...],
                  preferred_element_type=jnp.float32)
    o_ref[...] = (acc + b2_ref[...]).astype(o_ref.dtype)


def _two_stage_kernel_ktiled(x_ref, w1_ref, b1_ref, w2_ref, b2_ref, o_ref, acc_ref,
                             *, compute_dtype):
    k = pl.program_id(1)

    @pl.when(k == 0)
    def _():
        acc_ref[...] = jnp.zeros_like(acc_ref)

    x = x_ref[...].astype(compute_dtype)
    acc_ref[...] += jnp.dot(x, w1_ref[...], preferred_element_type=jnp.float32)

    @pl.when(k == pl.num_programs(1) - 1)
    def _():
        h = (acc_ref[...] + b1_ref[...]).astype(compute_dtype)
        acc2 = jnp.dot(h, w2_ref[...], preferred_element_type=jnp.float32)
        o_ref[...] = (acc2 + b2_ref[...]).astype(o_ref.dtype)


# --------------------------------- wrapper ---------------------------------- #

def make_flatten_head(w1, b1, w2, b2, *,
                      compute_dtype=jnp.bfloat16,
                      out_dtype=None,                 # None -> same dtype as x
                      target_block_bytes=1 << 20,     # ~1 MiB x-DMA per grid step
                      max_vmem_bytes=40 << 20,        # headroom for v7x's 64 MiB VMEM
                      max_nf_block=None,              # force K(nf) tiling below this
                      force_two_stage=False):
    """Prepare weights once; return forward(x): [..., d_model, patch_num] -> [..., tw].

    w1: (nf, 336), b1: (336,), w2: (336, tw), b2: (tw,)   (== nn.Linear.weight.T)
    """
    nf, hidden = w1.shape
    hidden2, tw = w2.shape
    assert hidden2 == hidden and b1.shape == (hidden,) and b2.shape == (tw,)

    tw_pad = _round_up(tw, LANE)
    hidden_pad = _round_up(hidden, LANE)
    w_itemsize = jnp.dtype(compute_dtype).itemsize

    # Fuse the two Linears only when it actually reduces weight bytes / FLOPs
    # (in practice: target_window sufficiently smaller than hidden=336).
    fused_w_elems = nf * tw_pad
    two_stage_w_elems = nf * hidden_pad + hidden_pad * tw_pad
    fuse = (not force_two_stage) and (fused_w_elems <= two_stage_w_elems)

    # ---- prepare (pad + cast) weights ONCE, outside the per-call path ----
    if fuse:
        w1f = w1.astype(jnp.float32)
        w2f = w2.astype(jnp.float32)
        wf = jnp.pad(w1f @ w2f, ((0, 0), (0, tw_pad - tw))).astype(compute_dtype)
        bf = jnp.pad(b1.astype(jnp.float32) @ w2f + b2.astype(jnp.float32),
                     (0, tw_pad - tw)).reshape(1, tw_pad)          # bias stays f32
        weights = (wf, bf)
        n_first_pad = tw_pad
    else:
        w1p = jnp.pad(w1, ((0, 0), (0, hidden_pad - hidden))).astype(compute_dtype)
        b1p = jnp.pad(b1.astype(jnp.float32), (0, hidden_pad - hidden)).reshape(1, hidden_pad)
        w2p = jnp.pad(w2, ((0, hidden_pad - hidden), (0, tw_pad - tw))).astype(compute_dtype)
        b2p = jnp.pad(b2.astype(jnp.float32), (0, tw_pad - tw)).reshape(1, tw_pad)
        weights = (w1p, b1p, w2p, b2p)
        n_first_pad = hidden_pad

    def forward(x):
        *lead, d_model, patch_num = x.shape
        assert d_model * patch_num == nf, "last two dims must flatten to nf"
        M = 1
        for d in lead:
            M *= int(d)
        odt = jnp.dtype(out_dtype) if out_dtype is not None else jnp.dtype(x.dtype)
        x_itemsize = jnp.dtype(x.dtype).itemsize
        out_itemsize = odt.itemsize

        # x is NOT cast or padded here (that would be an extra full HBM pass):
        # the kernel casts per tile; OOB rows of the ragged last block never
        # participate in any cross-row reduction and OOB output rows are dropped.
        x2d = x.reshape(M, nf)

        # ---- row tile: ~target_block_bytes per x DMA, >=2 grid steps if possible ----
        if M <= SUBLANE:
            tm = M
        else:
            tm = target_block_bytes // max(nf * x_itemsize, 1)
            tm = max(min(int(tm), 2048), SUBLANE)
            tm = (tm // SUBLANE) * SUBLANE
            # keep at least 2 row steps so v7x's second TensorCore gets work
            tm = min(tm, _round_up((M + 1) // 2, SUBLANE))
            tm = min(tm, (M // SUBLANE) * SUBLANE)
        rows = (M + tm - 1) // tm

        # ---- VMEM budgeting: optionally tile the contraction (nf) axis ----
        def vmem_need(tk, ktiled):
            need = 2 * tm * tk * x_itemsize            # x (double-buffered)
            need += 2 * tm * tw_pad * out_itemsize     # out (double-buffered)
            if fuse:
                need += (2 if ktiled else 1) * tk * tw_pad * w_itemsize
                need += tw_pad * 4
            else:
                need += (2 if ktiled else 1) * tk * hidden_pad * w_itemsize
                need += hidden_pad * 4
                need += hidden_pad * tw_pad * w_itemsize + tw_pad * 4
            if ktiled:
                need += tm * n_first_pad * 4           # f32 accumulator scratch
            return need

        nf_cap = max_nf_block if max_nf_block is not None else nf
        tk, ktiled = nf, False
        if nf > nf_cap or vmem_need(nf, False) > max_vmem_bytes:
            t = (min(nf_cap, nf) // LANE) * LANE
            while t >= LANE:
                if nf % t == 0 and vmem_need(t, True) <= max_vmem_bytes:
                    tk, ktiled = t, True
                    break
                t -= LANE
            # TODO(synk): if no 128-multiple divisor of nf fits VMEM, pad nf once
            # offline (weights + x) instead of falling back to the un-tiled path.

        vmem_limit = int(min(64 << 20,
                             max(16 << 20, vmem_need(tk, ktiled) * 3 // 2 + (1 << 20))))

        # ---- specs / kernel selection ----
        if not ktiled:
            grid = (rows,)
            dims = ("parallel",)
            x_spec = pl.BlockSpec((tm, nf), lambda i: (i, 0))
            out_spec = pl.BlockSpec((tm, tw_pad), lambda i: (i, 0))
            scratch = []
            if fuse:
                kernel = functools.partial(_fused_kernel, compute_dtype=compute_dtype)
                in_specs = [
                    x_spec,
                    _invariant_spec((nf, tw_pad), lambda i: (0, 0)),
                    _invariant_spec((1, tw_pad), lambda i: (0, 0)),
                ]
            else:
                kernel = functools.partial(_two_stage_kernel, compute_dtype=compute_dtype)
                in_specs = [
                    x_spec,
                    _invariant_spec((nf, hidden_pad), lambda i: (0, 0)),
                    _invariant_spec((1, hidden_pad), lambda i: (0, 0)),
                    _invariant_spec((hidden_pad, tw_pad), lambda i: (0, 0)),
                    _invariant_spec((1, tw_pad), lambda i: (0, 0)),
                ]
        else:
            grid = (rows, nf // tk)
            dims = ("parallel", "arbitrary")
            x_spec = pl.BlockSpec((tm, tk), lambda i, k: (i, k))
            out_spec = pl.BlockSpec((tm, tw_pad), lambda i, k: (i, 0))
            scratch = [pltpu.VMEM((tm, n_first_pad), jnp.float32)]
            if fuse:
                kernel = functools.partial(_fused_kernel_ktiled, compute_dtype=compute_dtype)
                in_specs = [
                    x_spec,
                    pl.BlockSpec((tk, tw_pad), lambda i, k: (k, 0)),
                    _invariant_spec((1, tw_pad), lambda i, k: (0, 0)),
                ]
            else:
                kernel = functools.partial(_two_stage_kernel_ktiled, compute_dtype=compute_dtype)
                in_specs = [
                    x_spec,
                    pl.BlockSpec((tk, hidden_pad), lambda i, k: (k, 0)),
                    _invariant_spec((1, hidden_pad), lambda i, k: (0, 0)),
                    _invariant_spec((hidden_pad, tw_pad), lambda i, k: (0, 0)),
                    _invariant_spec((1, tw_pad), lambda i, k: (0, 0)),
                ]

        flops = 2 * M * (nf * tw_pad if fuse else nf * hidden_pad + hidden_pad * tw_pad)
        w_bytes = sum(int(w.size) * jnp.dtype(w.dtype).itemsize for w in weights)
        cost = pl.CostEstimate(
            flops=flops,
            transcendentals=0,
            bytes_accessed=M * nf * x_itemsize + w_bytes + M * tw_pad * out_itemsize,
        )

        out2d = pl.pallas_call(
            kernel,
            out_shape=jax.ShapeDtypeStruct((M, tw_pad), odt),
            grid_spec=pltpu.PrefetchScalarGridSpec(
                num_scalar_prefetch=0,
                grid=grid,
                in_specs=in_specs,
                out_specs=out_spec,
                scratch_shapes=scratch,
            ),
            compiler_params=pltpu.CompilerParams(
                dimension_semantics=dims,
                vmem_limit_bytes=vmem_limit,
            ),
            cost_estimate=cost,
        )(x2d, *weights)

        return out2d[:, :tw].reshape(*lead, tw)

    return forward


# ----------------------------------- demo ------------------------------------ #

if __name__ == "__main__":
    HIDDEN = 336  # fixed by the module

    base_key = jax.random.PRNGKey(0)

    def run_case(name, case_key, B, n_vars, d_model, patch_num, target_window, **head_kw):
        nf = d_model * patch_num
        kx, kw1, kb1, kw2, kb2 = jax.random.split(case_key, 5)
        x = jax.random.normal(kx, (B, n_vars, d_model, patch_num), dtype=jnp.float32)
        # weights stored as (in_features, out_features) == nn.Linear.weight.T
        w1 = jax.random.normal(kw1, (nf, HIDDEN), dtype=jnp.float32) * 0.05
        b1 = jax.random.normal(kb1, (HIDDEN,), dtype=jnp.float32) * 0.05
        w2 = jax.random.normal(kw2, (HIDDEN, target_window), dtype=jnp.float32) * 0.05
        b2 = jax.random.normal(kb2, (target_window,), dtype=jnp.float32) * 0.05

        head = make_flatten_head(w1, b1, w2, b2, **head_kw)
        out = head(x)
        jax.block_until_ready(out)

        # Reference: same two-layer math as the PyTorch module, in f32.
        ref = x.reshape(B, n_vars, nf) @ w1 + b1
        ref = ref @ w2 + b2

        assert out.shape == (B, n_vars, target_window), (name, out.shape)
        rel = float(jnp.max(jnp.abs(out.astype(jnp.float32) - ref))
                    / (jnp.max(jnp.abs(ref)) + 1e-6))
        assert rel < 3e-2, (name, rel)

    k1, k2 = jax.random.split(base_key)

    # Case 1: short horizon -> fusion gate ON (single fused matmul),
    # multi-step "parallel" row grid (M=32, tm=16 -> 2 steps).
    run_case("fused", k1, B=2, n_vars=16, d_model=16, patch_num=8, target_window=48)

    # Case 2: long horizon (tw > hidden) -> fusion gate OFF (two-stage kernel),
    # and max_nf_block forces the K(nf)-tiled accumulator path (nf=1024, tk=512).
    run_case("two_stage_ktiled", k2, B=2, n_vars=4, d_model=64, patch_num=16,
             target_window=720, max_nf_block=512)

    print("KERNEL_OK")
</pallas_src>

<mosaic_0001>
module attributes {stable_mosaic.version = 11 : i64} {
  func.func @_fused_kernel(%arg0: i32, %arg1: memref<16x128xf32, #tpu.memory_space<vmem>>, %arg2: memref<128x128xbf16, #tpu.memory_space<vmem>>, %arg3: memref<1x128xf32, #tpu.memory_space<vmem>>, %arg4: memref<16x128xf32, #tpu.memory_space<vmem>>) attributes {dimension_semantics = [#tpu.dimension_semantics<parallel>], iteration_bounds = array<i64: 2>, scalar_prefetch = 0 : i64, scratch_operands = 0 : i64, tpu.core_type = #tpu.core_type<tc>, window_params = [{transform_indices = @transform_0, window_bounds = array<i64: 16, 128>}, {pipeline_mode = #tpu.pipeline_mode<synchronous>, transform_indices = @transform_1, window_bounds = array<i64: 128, 128>}, {pipeline_mode = #tpu.pipeline_mode<synchronous>, transform_indices = @transform_2, window_bounds = array<i64: 1, 128>}, {transform_indices = @transform_3, window_bounds = array<i64: 16, 128>}]} {
    %c0 = arith.constant 0 : index
    %c0_0 = arith.constant 0 : index
    %0 = vector.load %arg1[%c0, %c0_0] : memref<16x128xf32, #tpu.memory_space<vmem>>, vector<16x128xf32>
    %1 = arith.truncf %0 : vector<16x128xf32> to vector<16x128xbf16>
    %c0_1 = arith.constant 0 : index
    %c0_2 = arith.constant 0 : index
    %2 = vector.load %arg2[%c0_1, %c0_2] : memref<128x128xbf16, #tpu.memory_space<vmem>>, vector<128x128xbf16>
    %cst = arith.constant dense<0.000000e+00> : vector<16x128xf32>
    %3 = tpu.matmul %1, %2, %cst {dimension_numbers = #tpu.dot_dimension_numbers<[1], [0], [0], [1], [0, 0, 1, 1], [], []>} : vector<16x128xbf16>, vector<128x128xbf16>, vector<16x128xf32> -> vector<16x128xf32>
    %c0_3 = arith.constant 0 : index
    %c0_4 = arith.constant 0 : index
    %4 = vector.load %arg3[%c0_3, %c0_4] : memref<1x128xf32, #tpu.memory_space<vmem>>, vector<1x128xf32>
    %5 = vector.broadcast %4 : vector<1x128xf32> to vector<16x128xf32>
    %6 = arith.addf %3, %5 : vector<16x128xf32>
    %c0_5 = arith.constant 0 : index
    %c0_6 = arith.constant 0 : index
    %7 = vector.load %arg4[%c0_5, %c0_6] : memref<16x128xf32, #tpu.memory_space<vmem>>, vector<16x128xf32>
    tpu.vector_store %arg4[%c0_5, %c0_6], %6 {strides = array<i32>} : memref<16x128xf32, #tpu.memory_space<vmem>>, vector<16x128xf32>,
    return
  }
  func.func @transform_0(%arg0: i32) -> (i32, i32) {
    %c0_i32 = arith.constant 0 : i32
    %c0_i32_0 = arith.constant 0 : i32
    return %arg0, %c0_i32 : i32, i32
  }
  func.func @transform_1(%arg0: i32) -> (i32, i32) {
    %c0_i32 = arith.constant 0 : i32
    %c0_i32_0 = arith.constant 0 : i32
    %c0_i32_1 = arith.constant 0 : i32
    return %c0_i32, %c0_i32_0 : i32, i32
  }
  func.func @transform_2(%arg0: i32) -> (i32, i32) {
    %c0_i32 = arith.constant 0 : i32
    %c0_i32_0 = arith.constant 0 : i32
    %c0_i32_1 = arith.constant 0 : i32
    return %c0_i32, %c0_i32_0 : i32, i32
  }
  func.func @transform_3(%arg0: i32) -> (i32, i32) {
    %c0_i32 = arith.constant 0 : i32
    %c0_i32_0 = arith.constant 0 : i32
    return %arg0, %c0_i32 : i32, i32
  }
}

</mosaic_0001>

<llo_original>
// kernel: tpu_custom_call.1
$region0: #{tpu_custom_call.1}
  #allocation0 [shape = 'u32[]', space=smem, size = 0x4, offset = 0x4, fixed_abs, tag = 'smem constant byte address 0x4 - core index']
  #allocation1 [shape = 'u32[144,128]{1,0:T(1,128)}', space=vmem, size = 0x12000, scoped, tag = 'internal scratch']
  %s0 = inlined_call_operand.hbm [shape: f32[32,128], index: 0, kind: input, shape index: {}]
  %s1 = inlined_call_operand.hbm [shape: bf16[128,128], index: 1, kind: input, shape index: {}]
  %s2 = inlined_call_operand.vmem [shape: f32[1,128], index: 2, kind: input, shape index: {}]
  %s3 = inlined_call_operand.hbm [shape: f32[32,128], index: 3, kind: output, shape index: {}]
  %s4 = sld [smem:[#allocation0]]
  $region53: #{tpu_custom_call.1} parent=0
    _
  %s6 = ssub.s32 1, %s4
  %s7 = scalar_select 0, %s6, %s4
  $region1: #{tpu_custom_call.1} parent=0
    #allocation2 [shape = 'u8[16384]{0}', space=vmem, size = 0x4000, scoped, tag = 'input window, operand 0']
    #allocation3 [shape = 's32[2]{0}', space=sflag, size = 0x8, scoped, tag = 'scoped memory for tpu_custom_call.1']
    #allocation4 [shape = 's32[2]{0}', space=sflag, size = 0x8, scoped, tag = 'scoped memory for tpu_custom_call.1']
    #allocation5 [shape = 'u8[32768]{0}', space=vmem, size = 0x8000, scoped, tag = 'input window, operand 1, single buffered']
    #allocation6 [shape = 's32[1]{0}', space=sflag, size = 0x4, scoped, tag = 'scoped memory for tpu_custom_call.1']
    #allocation7 [shape = 'u8[16384]{0}', space=vmem, size = 0x4000, scoped, tag = 'output window, operand 0']
    %8 = vsyncpa [#allocation3], 0
    %s9 = scalar_lea.sflag [#allocation3], 1
    %10 = vsyncpa %s9, 0
    %11 = vsyncpa [#allocation6], 0
    %12 = vsyncpa [#allocation4], 0
    %s13 = scalar_lea.sflag [#allocation4], 1
    %14 = vsyncpa %s13, 0
    loop: start=0, step=1, limit=4
    $region2: #{tpu_custom_call.1} parent=1 // loop_pre_header
      _
    $region3: #{tpu_custom_call.1} parent=1 // loop_header
      %s16 = sphi 0, %s20
      %p17 = scmp.ge.s32.totalorder %s16, 4
      %s26 = sphi 0, %s28
      %s29 = sphi 0, %s26
      %s30 = sphi 0, %s29
      %s46 = sphi 0, %s30
      %s50 = sphi 0, %s50
      %s52 = sphi 0, %s50
      %s53 = sphi 0, %s52
      %s67 = sphi 0, %s53
      %s71 = sphi 0, %s71
      %s73 = sphi 0, %s71
      %s74 = sphi 0, %s73
      %s88 = sphi 0, %s74
      %s94 = sphi 0, %s96
      %s97 = sphi 0, %s94
      %s98 = sphi 0, %s97
      %s114 = sphi 0, %s98
    $region4: #{tpu_custom_call.1} parent=1 // loop_header_branch
      %19 = sbr.rel (%p17) target = $region8
    $region5: #{tpu_custom_call.1} parent=1 // loop_body
      %s21 = ssub.s32 %s16, 1
      %s22 = ssub.s32 %s16, 2
      %s23 = sadd.s32 %s16, 1
      %s24 = ssub.s32 %s16, %s23
      %p25 = scmp.eq.s32.totalorder %s24, 0
      %s27 = sadd.s32 %s26, 1
      %s28 = scalar_select %p25, %s26, %s27
      %p31 = pneg %p25
      %p32 = scmp.eq.s32.totalorder %s16, 1
      %p33 = por %p31, %p32
      %p34 = scmp.ne.s32.totalorder %s26, %s29
      %p35 = scmp.eq.s32.totalorder %s16, 0
      %p36 = por %p34, %p35
      %p37 = scmp.ne.s32.totalorder %s26, %s29
      %p38 = scmp.eq.s32.totalorder %s21, 1
      %p39 = por %p37, %p38
      %p40 = scmp.ne.s32.totalorder %s29, %s30
      %p41 = scmp.eq.s32.totalorder %s21, 0
      %p42 = por %p40, %p41
      %p43 = scmp.ne.s32.totalorder %s29, %s30
      %p44 = scmp.eq.s32.totalorder %s22, 1
      %p45 = por %p43, %p44
      %p47 = scmp.ne.s32.totalorder %s30, %s46
      %p48 = scmp.eq.s32.totalorder %s22, 0
      %p49 = por %p47, %p48
      %s51 = sadd.s32 %s50, 1
      %p54 = scmp.eq.s32.totalorder %s16, 1
      %p55 = scmp.ne.s32.totalorder %s50, %s52
      %p56 = scmp.eq.s32.totalorder %s16, 0
      %p57 = por %p55, %p56
      %p58 = scmp.ne.s32.totalorder %s50, %s52
      %p59 = scmp.eq.s32.totalorder %s21, 1
      %p60 = por %p58, %p59
      %p61 = scmp.ne.s32.totalorder %s52, %s53
      %p62 = scmp.eq.s32.totalorder %s21, 0
      %p63 = por %p61, %p62
      %p64 = scmp.ne.s32.totalorder %s52, %s53
      %p65 = scmp.eq.s32.totalorder %s22, 1
      %p66 = por %p64, %p65
      %p68 = scmp.ne.s32.totalorder %s53, %s67
      %p69 = scmp.eq.s32.totalorder %s22, 0
      %p70 = por %p68, %p69
      %s72 = sadd.s32 %s71, 1
      %p75 = scmp.eq.s32.totalorder %s16, 1
      %p76 = scmp.ne.s32.totalorder %s71, %s73
      %p77 = scmp.eq.s32.totalorder %s16, 0
      %p78 = por %p76, %p77
      %p79 = scmp.ne.s32.totalorder %s71, %s73
      %p80 = scmp.eq.s32.totalorder %s21, 1
      %p81 = por %p79, %p80
      %p82 = scmp.ne.s32.totalorder %s73, %s74
      %p83 = scmp.eq.s32.totalorder %s21, 0
      %p84 = por %p82, %p83
      %p85 = scmp.ne.s32.totalorder %s73, %s74
      %p86 = scmp.eq.s32.totalorder %s22, 1
      %p87 = por %p85, %p86
      %p89 = scmp.ne.s32.totalorder %s74, %s88
      %p90 = scmp.eq.s32.totalorder %s22, 0
      %p91 = por %p89, %p90
      %s92 = ssub.s32 %s16, %s23
      %p93 = scmp.eq.s32.totalorder %s92, 0
      %s95 = sadd.s32 %s94, 1
      %s96 = scalar_select %p93, %s94, %s95
      %p99 = pneg %p93
      %p100 = scmp.eq.s32.totalorder %s16, 1
      %p101 = por %p99, %p100
      %p102 = scmp.ne.s32.totalorder %s94, %s97
      %p103 = scmp.eq.s32.totalorder %s16, 0
      %p104 = por %p102, %p103
      %p105 = scmp.ne.s32.totalorder %s94, %s97
      %p106 = scmp.eq.s32.totalorder %s21, 1
      %p107 = por %p105, %p106
      %p108 = scmp.ne.s32.totalorder %s97, %s98
      %p109 = scmp.eq.s32.totalorder %s21, 0
      %p110 = por %p108, %p109
      %p111 = scmp.ne.s32.totalorder %s97, %s98
      %p112 = scmp.eq.s32.totalorder %s22, 1
      %p113 = por %p111, %p112
      %p115 = scmp.ne.s32.totalorder %s98, %s114
      %p116 = scmp.eq.s32.totalorder %s22, 0
      %p117 = por %p115, %p116
      %p118 = scmp.le.s32.totalorder 1, %s16
      %p119 = scmp.lt.s32.totalorder %s16, 3
      %p120 = pnand %p118, %p119
      %p121 = pneg %p120
      // Predicated region
      $region9: #{tpu_custom_call.1} parent=5 // pred_check
        _
      $region10: #{tpu_custom_call.1} parent=5 // pred_check_branch
        %123 = sbr.rel (%p120) target = $region12
      $region11: #{tpu_custom_call.1} parent=5 // pred_region
        %s124 = ssub.s32 %s16, 1
        // Predicated region
        $region13: #{tpu_custom_call.1} parent=11 // pred_check
          %p125 = pneg %p63
        $region14: #{tpu_custom_call.1} parent=11 // pred_check_branch
          %127 = sbr.rel (%p125) target = $region16
        $region15: #{tpu_custom_call.1} parent=11 // pred_region
          %s129 = ssub.s32 1024, 1024
          %130 = vsyncadd [#allocation6], %s129
          %s131 = sshll.u32 [#allocation5], 4
          %s132 = int_to_ptr.vmem [resolvable:$true] %s131
          %137 = dma.hbm_to_vmem [thread:$0]  %s1, 1024, %s132, [#allocation6], 64, 64, 4
        $region16: #{tpu_custom_call.1} parent=11 // pred_fallthru
          _
        // Predicated region
        $region17: #{tpu_custom_call.1} parent=11 // pred_check
          %p138 = pneg %p84
        $region18: #{tpu_custom_call.1} parent=11 // pred_check_branch
          %140 = sbr.rel (%p138) target = $region20
        $region19: #{tpu_custom_call.1} parent=11 // pred_region
          _
        $region20: #{tpu_custom_call.1} parent=11 // pred_fallthru
          _
      $region12: #{tpu_custom_call.1} parent=5 // pred_fallthru
        _
      %p141 = scmp.lt.s32.totalorder %s16, 2
      // Predicated region
      $region21: #{tpu_custom_call.1} parent=5 // pred_check
        %p142 = pneg %p141
      $region22: #{tpu_custom_call.1} parent=5 // pred_check_branch
        %144 = sbr.rel (%p142) target = $region24
      $region23: #{tpu_custom_call.1} parent=5 // pred_region
        // Predicated region
        $region25: #{tpu_custom_call.1} parent=23 // pred_check
          %p145 = pneg %p36
        $region26: #{tpu_custom_call.1} parent=23 // pred_check_branch
          %147 = sbr.rel (%p145) target = $region28
        $region27: #{tpu_custom_call.1} parent=23 // pred_region
          %s148 = sand.u32 %s26, 1
          %s149 = scalar_lea.sflag [#allocation3], %s148
          %s150 = sand.u32 %s26, 1
          %s151 = smul.addr %s150, 16
          %s152 = scalar_lea.vmem [#allocation2], %s151
          %s153 = smul.u32 2, %s16
          %s155 = ssub.s32 256, 256
          %156 = vsyncadd %s149, %s155
          %s157 = smul.addr %s153, 128
          %s158 = scalar_lea.hbm %s0, %s157
          %s159 = sshll.u32 %s152, 4
          %s160 = int_to_ptr.vmem [resolvable:$true] %s159
          %165 = dma.hbm_to_vmem [thread:$0]  %s158, 256, %s160, %s149, 128, 128, 8
        $region28: #{tpu_custom_call.1} parent=23 // pred_fallthru
          _
      $region24: #{tpu_custom_call.1} parent=5 // pred_fallthru
        _
      %p166 = scmp.le.s32.totalorder 1, %s16
      %p167 = scmp.lt.s32.totalorder %s16, 3
      %p168 = pnand %p166, %p167
      %p169 = pneg %p168
      // Predicated region
      $region29: #{tpu_custom_call.1} parent=5 // pred_check
        _
      $region30: #{tpu_custom_call.1} parent=5 // pred_check_branch
        %171 = sbr.rel (%p168) target = $region32
      $region31: #{tpu_custom_call.1} parent=5 // pred_region
        %s172 = ssub.s32 %s16, 1
        %s173 = sand.u32 %s29, 1
        %s174 = scalar_lea.sflag [#allocation3], %s173
        %s175 = sand.u32 %s29, 1
        %s176 = smul.addr %s175, 16
        %s177 = scalar_lea.vmem [#allocation2], %s176
        // Predicated region
        $region33: #{tpu_custom_call.1} parent=31 // pred_check
          %p178 = pneg %p42
        $region34: #{tpu_custom_call.1} parent=31 // pred_check_branch
          %180 = sbr.rel (%p178) target = $region36
        $region35: #{tpu_custom_call.1} parent=31 // pred_region
          %181 = dma.done %s174, 256
        $region36: #{tpu_custom_call.1} parent=31 // pred_fallthru
          _
        // Predicated region
        $region37: #{tpu_custom_call.1} parent=31 // pred_check
          %p182 = pneg %p63
        $region38: #{tpu_custom_call.1} parent=31 // pred_check_branch
          %184 = sbr.rel (%p182) target = $region40
        $region39: #{tpu_custom_call.1} parent=31 // pred_region
          %185 = dma.done [#allocation6], 1024
        $region40: #{tpu_custom_call.1} parent=31 // pred_fallthru
          _
        %s186 = sand.u32 %s29, 1
        %s187 = scalar_lea.sflag [#allocation3], %s186
        %s188 = sand.u32 %s29, 1
        %s189 = smul.addr %s188, 16
        %s190 = scalar_lea.vmem [#allocation2], %s189
        %p191 = pneg %p42
        %p192 = pneg %p39
        %p193 = pneg %p63
        %p194 = pneg %p60
        %p195 = pneg %p84
        %p196 = pneg %p81
        %p197 = pneg %p110
        %p198 = pneg %p107
        %s199 = sand.u32 %s97, 1
        %s200 = scalar_lea.sflag [#allocation4], %s199
        %s201 = sand.u32 %s97, 1
        %s202 = smul.addr %s201, 16
        %s203 = scalar_lea.vmem [#allocation7], %s202
        %s204 = smul.u32 2, %s21
        %s205 = smul.u32 2, %s21
        %v207 = vld [vmem:[%s177] sm:$0xff]
        %v208 = vld [vmem:[%s177 + $0x8] sm:$0xff]
        %v209 = vpack.c.bf16 %v208, %v207
        %v210 = vld [vmem:[#allocation5] sm:$0xf]
        %v211 = vld [vmem:[#allocation5 + $0x4] sm:$0xf]
        %v212 = vld [vmem:[#allocation5 + $0x8] sm:$0xf]
        %v213 = vld [vmem:[#allocation5 + $0xc] sm:$0xf]
        %v214 = vld [vmem:[#allocation5 + $0x10] sm:$0xf]
        %v215 = vld [vmem:[#allocation5 + $0x14] sm:$0xf]
        %v216 = vld [vmem:[#allocation5 + $0x18] sm:$0xf]
        %v217 = vld [vmem:[#allocation5 + $0x1c] sm:$0xf]
        %v218 = vld [vmem:[#allocation5 + $0x20] sm:$0xf]
        %v219 = vld [vmem:[#allocation5 + $0x24] sm:$0xf]
        %v220 = vld [vmem:[#allocation5 + $0x28] sm:$0xf]
        %v221 = vld [vmem:[#allocation5 + $0x2c] sm:$0xf]
        %v222 = vld [vmem:[#allocation5 + $0x30] sm:$0xf]
        %v223 = vld [vmem:[#allocation5 + $0x34] sm:$0xf]
        %v224 = vld [vmem:[#allocation5 + $0x38] sm:$0xf]
        %v225 = vld [vmem:[#allocation5 + $0x3c] sm:$0xf]
        %v226 = vld [vmem:[%s2] sm:$0x1]
        %v228 = vlaneseq
        %v229 = vshrl.u32 %v228, 7
        %v230 = vsub.s32 0, %v229
        %v231 = vrot.slane %v226, %v230
        %v249 = vunpack.c.l.b16 %v210
        %v250 = vunpack.c.l.b16 %v211
        %v251 = vunpack.c.l.b16 %v212
        %v252 = vunpack.c.l.b16 %v213
        %v253 = vunpack.c.l.b16 %v214
        %v254 = vunpack.c.l.b16 %v215
        %v255 = vunpack.c.l.b16 %v216
        %v256 = vunpack.c.l.b16 %v217
        %v257 = vunpack.c.l.b16 %v218
        %v258 = vunpack.c.l.b16 %v219
        %v259 = vunpack.c.l.b16 %v220
        %v260 = vunpack.c.l.b16 %v221
        %v261 = vunpack.c.l.b16 %v222
        %v262 = vunpack.c.l.b16 %v223
        %v263 = vunpack.c.l.b16 %v224
        %v264 = vunpack.c.l.b16 %v225
        %v265 = vpack.c.b16 %v250, %v249
        %v266 = vpack.c.b16 %v252, %v251
        %v267 = vpack.c.b16 %v254, %v253
        %v268 = vpack.c.b16 %v256, %v255
        %v269 = vpack.c.b16 %v258, %v257
        %v270 = vpack.c.b16 %v260, %v259
        %v271 = vpack.c.b16 %v262, %v261
        %v272 = vpack.c.b16 %v264, %v263
        %281 = vmatprep.subr.bf16.mxu0 0
        %282 = vmatpush1.bf16.msra.mxu0 %v265
        %283 = vmatprep.subr.bf16.mxu0 0
        %284 = vmatpush1.bf16.msra.mxu0 %v266
        %285 = vmatprep.subr.bf16.mxu0 0
        %286 = vmatpush1.bf16.msra.mxu0 %v267
        %287 = vmatprep.subr.bf16.mxu0 0
        %288 = vmatpush1.bf16.msra.mxu0 %v268
        %289 = vmatprep.subr.bf16.mxu0 0
        %290 = vmatpush1.bf16.msra.mxu0 %v269
        %291 = vmatprep.subr.bf16.mxu0 0
        %292 = vmatpush1.bf16.msra.mxu0 %v270
        %293 = vmatprep.subr.bf16.mxu0 0
        %294 = vmatpush1.bf16.msra.mxu0 %v271
        %295 = vmatprep.subr.bf16.mxu0 0
        %296 = vmatpush1.bf16.msra.mxu0 %v272
        %297 = vmatprep.subr.bf16.mxu0 0
        %298 = vmatpush1.bf16.msra.mxu0 0
        %299 = vmatprep.subr.bf16.mxu0 0
        %300 = vmatpush1.bf16.msra.mxu0 0
        %301 = vmatprep.subr.bf16.mxu0 0
        %302 = vmatpush1.bf16.msra.mxu0 0
        %303 = vmatprep.subr.bf16.mxu0 0
        %304 = vmatpush1.bf16.msra.mxu0 0
        %305 = vmatprep.subr.bf16.mxu0 0
        %306 = vmatpush1.bf16.msra.mxu0 0
        %307 = vmatprep.subr.bf16.mxu0 0
        %308 = vmatpush1.bf16.msra.mxu0 0
        %309 = vmatprep.subr.bf16.mxu0 0
        %310 = vmatpush1.bf16.msra.mxu0 0
        %311 = vmatprep.subr.bf16.mxu0 0
        %312 = vmatpush1.bf16.msra.mxu0 0
        %313 = vmatprep.mubr.bf16.mxu0 0
        %314 = vmatmul.mubr.bf16.gmra.mrb[0].mxu0 %v209
        %v315 = vpop.f32.mrb[0].mxu0
        %v316 = vadd.f32 %v231, %v315
        %v317 = vpop.f32.mrb[0].mxu0
        %v318 = vpop.f32.mrb[0].mxu0
        %v319 = vadd.f32 %v231, %v318
        %v320 = vpop.f32.mrb[0].mxu0
        %321 = vdwg.mxu0
        %322 = vst [vmem:[%s203] sm:$0xff] %v316
        %323 = vst [vmem:[%s203 + $0x8] sm:$0xff] %v319
        %s324 = sand.u32 %s97, 1
        %s325 = scalar_lea.sflag [#allocation4], %s324
        %s326 = sand.u32 %s97, 1
        %s327 = smul.addr %s326, 16
        %s328 = scalar_lea.vmem [#allocation7], %s327
        // Predicated region
        $region41: #{tpu_custom_call.1} parent=31 // pred_check
          %p329 = pneg %p107
        $region42: #{tpu_custom_call.1} parent=31 // pred_check_branch
          %331 = sbr.rel (%p329) target = $region44
        $region43: #{tpu_custom_call.1} parent=31 // pred_region
          %s332 = smul.u32 2, %s21
          %s334 = ssub.s32 256, 256
          %335 = vsyncadd %s325, %s334
          %s336 = smul.addr %s332, 128
          %s337 = scalar_lea.hbm %s3, %s336
          %s338 = sshll.u32 %s328, 4
          %s339 = int_to_ptr.vmem [resolvable:$true] %s338
          %344 = dma.vmem_to_hbm [thread:$0]  %s339, 256, %s337, %s325, 128, 128, 8
        $region44: #{tpu_custom_call.1} parent=31 // pred_fallthru
          _
      $region32: #{tpu_custom_call.1} parent=5 // pred_fallthru
        _
      %p345 = scmp.le.s32.totalorder 2, %s16
      // Predicated region
      $region45: #{tpu_custom_call.1} parent=5 // pred_check
        %p346 = pneg %p345
      $region46: #{tpu_custom_call.1} parent=5 // pred_check_branch
        %348 = sbr.rel (%p346) target = $region48
      $region47: #{tpu_custom_call.1} parent=5 // pred_region
        %s349 = ssub.s32 %s16, 2
        // Predicated region
        $region49: #{tpu_custom_call.1} parent=47 // pred_check
          %p350 = pneg %p113
        $region50: #{tpu_custom_call.1} parent=47 // pred_check_branch
          %352 = sbr.rel (%p350) target = $region52
        $region51: #{tpu_custom_call.1} parent=47 // pred_region
          %s353 = sand.u32 %s98, 1
          %s354 = scalar_lea.sflag [#allocation4], %s353
          %s355 = sand.u32 %s98, 1
          %s356 = smul.addr %s355, 16
          %s357 = scalar_lea.vmem [#allocation7], %s356
          %358 = dma.done %s354, 256
        $region52: #{tpu_custom_call.1} parent=47 // pred_fallthru
          _
      $region48: #{tpu_custom_call.1} parent=5 // pred_fallthru
        _
    $region6: #{tpu_custom_call.1} parent=1 // loop_footer
      %s20 = sadd.s32 1, %s16
    $region7: #{tpu_custom_call.1} parent=1 // loop_footer_branch
      %15 = sbr.rel target = $region3
    $region8: #{tpu_custom_call.1} parent=1 // loop_exit
      _
    %359 = vsyncpa [#allocation3], 1
    %s360 = scalar_lea.sflag [#allocation3], 1
    %361 = vsyncpa %s360, 1
    %362 = vsyncpa [#allocation6], 1
    %363 = vsyncpa [#allocation4], 1
    %s364 = scalar_lea.sflag [#allocation4], 1
    %365 = vsyncpa %s364, 1

</llo_original>
